<compile_context>
chip_gen: v6e
topology: v6e:2x2x1
jax: 0.10.0
libtpu: 0.0.40
codegen_flags: <defaults>
</compile_context>

<pallas_src>
import functools

import jax
import jax.numpy as jnp
from jax.experimental import pallas as pl
from jax.experimental.pallas import tpu as pltpu

_NEG_BIG = -1e30  # bias for padded output columns -> softmax probability exactly 0


def _round_up(x, m):
    return (x + m - 1) // m * m


@functools.lru_cache(maxsize=1)
def _vmem_capacity_bytes():
    try:
        return int(pltpu.get_tpu_info().vmem_capacity_bytes)
    except Exception:  # unknown backend / API drift -> conservative (v7x-sized) default
        return 64 * 1024 * 1024


def _ctc_head_kernel(x_ref, w_ref, b_ref, out_ref, *, n_valid, approx_recip):
    # x_ref:   (tm, C_in)          native input dtype (cast to matmul dtype here)
    # w_ref:   (C_in, C_out_pad)   compute dtype, lane-dense MXU RHS layout (no transpose)
    # b_ref:   (1, C_out_pad)      f32 (-1e30 in padded columns)
    # out_ref: (tm, n_valid)       row/column-exact output block
    x = x_ref[...].astype(w_ref.dtype)
    logits = jnp.dot(x, w_ref[...], preferred_element_type=jnp.float32)
    logits = logits + b_ref[...]                    # broadcast bias over rows (f32)
    # Numerically-stable softmax over out_channels, all in f32.
    m = jnp.max(logits, axis=-1, keepdims=True)
    e = jnp.exp(logits - m)                         # padded cols -> exp(-1e30 - m) == 0
    denom = jnp.sum(e, axis=-1, keepdims=True)
    if approx_recip:
        inv = pl.reciprocal(denom, approx=True)     # EUP slot; VPU stays free
    else:
        inv = 1.0 / denom
    out_ref[...] = (e[:, :n_valid] * inv).astype(out_ref.dtype)


@functools.partial(
    jax.jit,
    static_argnames=("tm", "compute_dtype", "out_dtype", "approx_reciprocal"),
)
def ctc_head_forward(x, w, b, *, tm=512, compute_dtype=jnp.bfloat16,
                     out_dtype=jnp.float32, approx_reciprocal=True):
    """CTCHead eval forward: softmax(x @ w.T + b, axis=2).

    x: (B, T, C_in), w: (C_out, C_in) [PyTorch nn.Linear layout], b: (C_out,).
    out_dtype=jnp.bfloat16 halves the dominant output-writeback HBM traffic when the
    caller can consume bf16 probabilities. approx_reciprocal=False gives exact row sums.
    """
    B, T, C_in = x.shape
    C_out = w.shape[0]
    M = B * T

    x_bytes = jnp.dtype(x.dtype).itemsize
    w_bytes = jnp.dtype(compute_dtype).itemsize
    out_bytes = jnp.dtype(out_dtype).itemsize

    # ---- static tiling decisions (all trace-time Python ints) --------------
    C_out_pad = _round_up(C_out, 128)      # lane-dense weight / softmax width

    vmem_cap = _vmem_capacity_bytes()
    vmem_budget = (3 * vmem_cap) // 4      # ~96 MiB on v5e/v6e, ~48 MiB on v7x
    # >=4 grid steps only matters on dual-TensorCore v7x ("parallel" axis megacore
    # sharding); single-TC v5e/v6e only need >=2 steps for DMA/compute overlap.
    min_steps = 4 if vmem_cap <= 96 * 1024 * 1024 else 2

    def vmem_est(t):
        return (2 * t * C_in * x_bytes              # x tile, double-buffered
                + 2 * C_in * C_out_pad * w_bytes    # resident weight (default dbl-buffer)
                + 2 * C_out_pad * 4                 # bias
                + 2 * t * C_out * out_bytes         # output tile, double-buffered
                + 2 * t * C_out_pad * 4)            # f32 logits/exp live temporaries

    # Row-tile granularity: >=16 (bf16 sublane packing); MXU-friendly multiples for big M.
    granule = 256 if M >= 1024 else (128 if M >= 256 else 16)
    if M <= granule:
        tm_eff = M                                  # single full-dim block, no masking
    else:
        tm_eff = min(_round_up(tm, granule), _round_up(M, granule))
        tm_eff = min(tm_eff, max(granule, _round_up(pl.cdiv(M, min_steps), granule)))
        while tm_eff > granule and vmem_est(tm_eff) > vmem_budget:
            tm_eff = max(granule, _round_up(tm_eff // 2, granule))
    grid = (pl.cdiv(M, tm_eff),)                    # partial final block handled by Pallas
    vmem_limit = min(vmem_cap, max(32 * 1024 * 1024, int(1.25 * vmem_est(tm_eff))))

    # ---- one-time weight/bias prep (tiny; fused by XLA) ---------------------
    # Pre-transpose to (C_in, C_out_pad): lane-dense, natural MXU RHS, no per-step rearrange.
    w_p = w.astype(compute_dtype).T
    b_p = b.astype(jnp.float32)
    if C_out_pad != C_out:
        w_p = jnp.pad(w_p, ((0, 0), (0, C_out_pad - C_out)))
        b_p = jnp.pad(b_p, (0, C_out_pad - C_out), constant_values=_NEG_BIG)
    b_p = b_p.reshape(1, C_out_pad)

    x2 = x.reshape(M, C_in)                         # free reshape; no cast, no pad

    kernel = functools.partial(_ctc_head_kernel, n_valid=C_out,
                               approx_recip=approx_reciprocal)

    cost = pl.CostEstimate(
        flops=2 * M * C_in * C_out,
        transcendentals=M * C_out_pad,
        bytes_accessed=(M * C_in * x_bytes + C_in * C_out_pad * w_bytes
                        + 4 * C_out_pad + M * C_out * out_bytes),
    )

    out2 = pl.pallas_call(
        kernel,
        out_shape=jax.ShapeDtypeStruct((M, C_out), out_dtype),   # row/column-exact
        grid_spec=pltpu.PrefetchScalarGridSpec(
            num_scalar_prefetch=0,
            grid=grid,
            in_specs=[
                pl.BlockSpec((tm_eff, C_in), lambda i: (i, 0)),
                pl.BlockSpec((C_in, C_out_pad), lambda i: (0, 0)),   # grid-invariant
                pl.BlockSpec((1, C_out_pad), lambda i: (0, 0)),      # grid-invariant
            ],
            out_specs=pl.BlockSpec((tm_eff, C_out), lambda i: (i, 0)),
        ),
        compiler_params=pltpu.CompilerParams(
            dimension_semantics=("parallel",),
            vmem_limit_bytes=vmem_limit,
        ),
        cost_estimate=cost,
    )(x2, w_p, b_p)

    return out2.reshape(B, T, C_out)                # free reshape; no slice copy


def _reference(x, w, b, compute_dtype=jnp.bfloat16):
    logits = jnp.einsum(
        "btc,oc->bto",
        x.astype(compute_dtype), w.astype(compute_dtype),
        preferred_element_type=jnp.float32,
    ) + b.astype(jnp.float32)
    return jax.nn.softmax(logits, axis=2)


if __name__ == "__main__":
    key = jax.random.PRNGKey(0)

    # Case 1: small module-consistent shapes (batch=2, seq=8, in=32, out=256).
    # Case 2: ragged rows + non-128-multiple vocab (full-dim blocks / in-kernel column slice).
    # Case 3: multi-step grid with a partial final row block (masked writeback path).
    # Case 4: bf16 output probabilities (halved writeback traffic), looser tolerance.
    cases = [
        dict(B=2, T=8, C_in=32, C_out=256, out_dtype=jnp.float32, tol=5e-3),
        dict(B=2, T=7, C_in=32, C_out=200, out_dtype=jnp.float32, tol=5e-3),
        dict(B=3, T=40, C_in=32, C_out=200, out_dtype=jnp.float32, tol=5e-3),
        dict(B=2, T=8, C_in=32, C_out=256, out_dtype=jnp.bfloat16, tol=1e-2),
    ]
    for c in cases:
        B, T, C_in, C_out = c["B"], c["T"], c["C_in"], c["C_out"]
        key, kx, kw, kb = jax.random.split(key, 4)
        x = jax.random.normal(kx, (B, T, C_in), dtype=jnp.float32)
        w = jax.random.normal(kw, (C_out, C_in), dtype=jnp.float32) * 0.05  # (out, in)
        b = jax.random.normal(kb, (C_out,), dtype=jnp.float32) * 0.01

        out = ctc_head_forward(x, w, b, out_dtype=c["out_dtype"])
        out = jax.block_until_ready(out)

        ref = _reference(x, w, b)
        assert out.shape == (B, T, C_out)
        assert out.dtype == c["out_dtype"]
        out_f32 = out.astype(jnp.float32)
        assert jnp.allclose(out_f32, ref, atol=c["tol"], rtol=0), "mismatch vs reference"
        assert jnp.allclose(jnp.sum(out_f32, axis=2), 1.0, atol=c["tol"]), \
            "rows don't sum to 1"

    print("KERNEL_OK")
</pallas_src>

<mosaic_0001>
module attributes {stable_mosaic.version = 11 : i64} {
  func.func @_ctc_head_kernel(%arg0: i32, %arg1: memref<16x32xf32, #tpu.memory_space<vmem>>, %arg2: memref<32x256xbf16, #tpu.memory_space<vmem>>, %arg3: memref<1x256xf32, #tpu.memory_space<vmem>>, %arg4: memref<16x256xf32, #tpu.memory_space<vmem>>) attributes {dimension_semantics = [#tpu.dimension_semantics<parallel>], iteration_bounds = array<i64: 1>, scalar_prefetch = 0 : i64, scratch_operands = 0 : i64, tpu.core_type = #tpu.core_type<tc>, window_params = [{transform_indices = @transform_0, window_bounds = array<i64: 16, 32>}, {pipeline_mode = #tpu.pipeline_mode<synchronous>, transform_indices = @transform_1, window_bounds = array<i64: 32, 256>}, {pipeline_mode = #tpu.pipeline_mode<synchronous>, transform_indices = @transform_2, window_bounds = array<i64: 1, 256>}, {transform_indices = @transform_3, window_bounds = array<i64: 16, 256>}]} {
    %c0 = arith.constant 0 : index
    %c0_0 = arith.constant 0 : index
    %0 = vector.load %arg1[%c0, %c0_0] : memref<16x32xf32, #tpu.memory_space<vmem>>, vector<16x32xf32>
    %1 = arith.truncf %0 : vector<16x32xf32> to vector<16x32xbf16>
    %c0_1 = arith.constant 0 : index
    %c0_2 = arith.constant 0 : index
    %2 = vector.load %arg2[%c0_1, %c0_2] : memref<32x256xbf16, #tpu.memory_space<vmem>>, vector<32x256xbf16>
    %cst = arith.constant dense<0.000000e+00> : vector<16x256xf32>
    %3 = tpu.matmul %1, %2, %cst {dimension_numbers = #tpu.dot_dimension_numbers<[1], [0], [0], [1], [0, 0, 1, 1], [], []>} : vector<16x32xbf16>, vector<32x256xbf16>, vector<16x256xf32> -> vector<16x256xf32>
    %c0_3 = arith.constant 0 : index
    %c0_4 = arith.constant 0 : index
    %4 = vector.load %arg3[%c0_3, %c0_4] : memref<1x256xf32, #tpu.memory_space<vmem>>, vector<1x256xf32>
    %5 = vector.broadcast %4 : vector<1x256xf32> to vector<16x256xf32>
    %6 = arith.addf %3, %5 : vector<16x256xf32>
    %cst_5 = arith.constant dense<0xFF800000> : vector<16xf32>
    %7 = vector.multi_reduction <maximumf>, %6, %cst_5 [1] : vector<16x256xf32> to vector<16xf32>
    %8 = vector.shape_cast %7 : vector<16xf32> to vector<16x1xf32>
    %9 = vector.broadcast %8 : vector<16x1xf32> to vector<16x256xf32>
    %10 = arith.subf %6, %9 : vector<16x256xf32>
    %11 = math.exp %10 : vector<16x256xf32>
    %cst_6 = arith.constant dense<0.000000e+00> : vector<16xf32>
    %12 = vector.multi_reduction <add>, %11, %cst_6 [1] : vector<16x256xf32> to vector<16xf32>
    %13 = vector.shape_cast %12 : vector<16xf32> to vector<16x1xf32>
    %14 = tpu.reciprocal %13 {approx = true} : vector<16x1xf32> -> vector<16x1xf32>
    %15 = vector.broadcast %14 : vector<16x1xf32> to vector<16x256xf32>
    %16 = arith.mulf %11, %15 : vector<16x256xf32>
    %c0_7 = arith.constant 0 : index
    %c0_8 = arith.constant 0 : index
    %17 = vector.load %arg4[%c0_7, %c0_8] : memref<16x256xf32, #tpu.memory_space<vmem>>, vector<16x256xf32>
    tpu.vector_store %arg4[%c0_7, %c0_8], %16 {strides = array<i32>} : memref<16x256xf32, #tpu.memory_space<vmem>>, vector<16x256xf32>,
    return
  }
  func.func @transform_0(%arg0: i32) -> (i32, i32) {
    %c0_i32 = arith.constant 0 : i32
    %c0_i32_0 = arith.constant 0 : i32
    return %arg0, %c0_i32 : i32, i32
  }
  func.func @transform_1(%arg0: i32) -> (i32, i32) {
    %c0_i32 = arith.constant 0 : i32
    %c0_i32_0 = arith.constant 0 : i32
    %c0_i32_1 = arith.constant 0 : i32
    return %c0_i32, %c0_i32_0 : i32, i32
  }
  func.func @transform_2(%arg0: i32) -> (i32, i32) {
    %c0_i32 = arith.constant 0 : i32
    %c0_i32_0 = arith.constant 0 : i32
    %c0_i32_1 = arith.constant 0 : i32
    return %c0_i32, %c0_i32_0 : i32, i32
  }
  func.func @transform_3(%arg0: i32) -> (i32, i32) {
    %c0_i32 = arith.constant 0 : i32
    %c0_i32_0 = arith.constant 0 : i32
    return %arg0, %c0_i32 : i32, i32
  }
}

</mosaic_0001>

<llo_original>
// kernel: ctc_head_forward.1
$region0: #{ctc_head_forward.1}
  #allocation0 [shape = 'u32[]', space=smem, size = 0x4, offset = 0x4, fixed_abs, tag = 'smem constant byte address 0x4 - core index']
  #allocation1 [shape = 'u32[144,128]{1,0:T(1,128)}', space=vmem, size = 0x12000, scoped, tag = 'internal scratch']
  %s0 = inlined_call_operand.vmem [shape: f32[16,32], index: 0, kind: input, shape index: {}]
  %s1 = inlined_call_operand.vmem [shape: bf16[32,256], index: 1, kind: input, shape index: {}]
  %s2 = inlined_call_operand.vmem [shape: f32[1,256], index: 2, kind: input, shape index: {}]
  %s3 = inlined_call_operand.hbm [shape: f32[16,256], index: 3, kind: output, shape index: {}]
  %s4 = sld [smem:[#allocation0]]
  $region22: #{ctc_head_forward.1} parent=0
    _
  %s6 = ssub.s32 1, %s4
  %s7 = scalar_select 0, %s6, %s4
  $region1: #{ctc_head_forward.1} parent=0
    #allocation2 [shape = 'u8[16384]{0}', space=vmem, size = 0x4000, scoped, tag = 'output window, operand 0, single buffered']
    #allocation3 [shape = 's32[1]{0}', space=sflag, size = 0x4, scoped, tag = 'scoped memory for ctc_head_forward.1']
    %8 = vsyncpa [#allocation3], 0
    // Predicated region
    $region2: #{ctc_head_forward.1} parent=1 // pred_check
      _
    $region3: #{ctc_head_forward.1} parent=1 // pred_check_branch
      %10 = sbr.rel (0) target = $region5
    $region4: #{ctc_head_forward.1} parent=1 // pred_region
      _
    $region5: #{ctc_head_forward.1} parent=1 // pred_fallthru
      _
    // Predicated region
    $region6: #{ctc_head_forward.1} parent=1 // pred_check
      _
    $region7: #{ctc_head_forward.1} parent=1 // pred_check_branch
      %12 = sbr.rel (0) target = $region9
    $region8: #{ctc_head_forward.1} parent=1 // pred_region
      _
    $region9: #{ctc_head_forward.1} parent=1 // pred_fallthru
      _
    // Predicated region
    $region10: #{ctc_head_forward.1} parent=1 // pred_check
      _
    $region11: #{ctc_head_forward.1} parent=1 // pred_check_branch
      %14 = sbr.rel (0) target = $region13
    $region12: #{ctc_head_forward.1} parent=1 // pred_region
      _
    $region13: #{ctc_head_forward.1} parent=1 // pred_fallthru
      _
    %v16 = vld [vmem:[%s0] sm:$0xff]
    %v17 = vld [vmem:[%s0 + $0x8] sm:$0xff]
    %v18 = vpack.c.bf16 %v17, %v16
    %v19 = vld [vmem:[%s1] sm:$0xff]
    %v20 = vld [vmem:[%s1 + $0x8] sm:$0xff]
    %v21 = vld [vmem:[%s1 + $0x10] sm:$0xff]
    %v22 = vld [vmem:[%s1 + $0x18] sm:$0xff]
    %v23 = vld [vmem:[%s2] sm:$0x3]
    %v25 = vlaneseq
    %v26 = vshrl.u32 %v25, 7
    %v27 = vsub.s32 0, %v26
    %v28 = vrot.slane %v23, %v27
    %v29 = vlaneseq
    %v30 = vshrl.u32 %v29, 7
    %v31 = vsub.s32 1, %v30
    %v32 = vrot.slane %v23, %v31
    %v39 = vunpack.c.l.b16 %v19
    %v40 = vunpack.c.h.b16 %v19
    %v41 = vunpack.c.l.b16 %v20
    %v42 = vunpack.c.h.b16 %v20
    %v43 = vunpack.c.l.b16 %v21
    %v44 = vunpack.c.h.b16 %v21
    %v45 = vunpack.c.l.b16 %v22
    %v46 = vunpack.c.h.b16 %v22
    %v47 = vpack.c.b16 %v41, %v39
    %v48 = vpack.c.b16 %v42, %v40
    %v49 = vpack.c.b16 %v45, %v43
    %v50 = vpack.c.b16 %v46, %v44
    %vm55 = vcmask 261120
    %v57 = vsel %vm55, %v18, 0
    %59 = vmatprep.subr.bf16.mxu0 0
    %60 = vmatpush1.bf16.msra.mxu0 0
    %61 = vmatprep.subr.bf16.mxu0 0
    %62 = vmatpush1.bf16.msra.mxu0 0
    %63 = vmatprep.subr.bf16.mxu0 0
    %64 = vmatpush1.bf16.msra.mxu0 0
    %65 = vmatprep.subr.bf16.mxu0 0
    %66 = vmatpush1.bf16.msra.mxu0 0
    %67 = vmatprep.subr.bf16.mxu0 0
    %68 = vmatpush1.bf16.msra.mxu0 0
    %69 = vmatprep.subr.bf16.mxu0 0
    %70 = vmatpush1.bf16.msra.mxu0 0
    %71 = vmatprep.subr.bf16.mxu0 %v50
    %72 = vmatpush1.bf16.msra.mxu0 %v49
    %73 = vmatprep.subr.bf16.mxu0 %v48
    %74 = vmatpush1.bf16.msra.mxu0 %v47
    %75 = vmatprep.subr.bf16.mxu0 0
    %76 = vmatpush2.bf16.msra.mxu0 0
    %77 = vmatprep.subr.bf16.mxu0 0
    %78 = vmatpush2.bf16.msra.mxu0 0
    %79 = vmatprep.subr.bf16.mxu0 0
    %80 = vmatpush2.bf16.msra.mxu0 0
    %81 = vmatprep.subr.bf16.mxu0 0
    %82 = vmatpush2.bf16.msra.mxu0 0
    %83 = vmatprep.subr.bf16.mxu0 0
    %84 = vmatpush2.bf16.msra.mxu0 0
    %85 = vmatprep.subr.bf16.mxu0 0
    %86 = vmatpush2.bf16.msra.mxu0 0
    %87 = vmatprep.subr.bf16.mxu0 0
    %88 = vmatpush2.bf16.msra.mxu0 0
    %89 = vmatprep.subr.bf16.mxu0 0
    %90 = vmatpush2.bf16.msra.mxu0 0
    %91 = vmatprep.mubr.bf16.mxu0 0
    %92 = vmatmul.mubr.bf16.gmra.mxu0 %v57
    %v93 = vpop.f32.mrf.mxu0
    %v94 = vadd.f32 %v28, %v93
    %v95 = vpop.f32.mrf.mxu0
    %v96 = vadd.f32 %v32, %v95
    %v97 = vpop.f32.mrf.mxu0
    %v98 = vadd.f32 %v28, %v97
    %v99 = vpop.f32.mrf.mxu0
    %v100 = vadd.f32 %v32, %v99
    %101 = vdwg.mxu0
    %v102 = vmax.f32 %v94, %v96
    %103 = vmax.xlane.f32.xlu0 %v102
    %v104 = vpop.xlane.xlu0 %103
    %v105 = vmax.f32 %v98, %v100
    %106 = vmax.xlane.f32.xlu0 %v105
    %v107 = vpop.xlane.xlu0 %106
    %v108 = vsub.f32 %v94, %v104
    %v109 = vsub.f32 %v96, %v104
    %v110 = vsub.f32 %v98, %v107
    %v111 = vsub.f32 %v100, %v107
    %v112 = vmul.f32 %v108, 1.442695
    %v113 = vpow.pop %v112
    %v114 = vmul.f32 %v109, 1.442695
    %v115 = vpow.pop %v114
    %v116 = vmul.f32 %v110, 1.442695
    %v117 = vpow.pop %v116
    %v118 = vmul.f32 %v111, 1.442695
    %v119 = vpow.pop %v118
    %v120 = vadd.f32 %v113, %v115
    %121 = vadd.xlane.f32.xlu0 %v120
    %v122 = vpop.xlane.xlu0 %121
    %v123 = vadd.f32 %v117, %v119
    %124 = vadd.xlane.f32.xlu0 %v123
    %v125 = vpop.xlane.xlu0 %124
    %v126 = vrcp.pop %v122
    %v127 = vrcp.pop %v125
    %v128 = vmul.f32 %v113, %v126
    %v129 = vmul.f32 %v115, %v126
    %v130 = vmul.f32 %v117, %v127
    %v131 = vmul.f32 %v119, %v127
    %132 = vst [vmem:[#allocation2] sm:$0xff] %v128
    %133 = vst [vmem:[#allocation2 + $0x8] sm:$0xff] %v129
    %134 = vst [vmem:[#allocation2 + $0x10] sm:$0xff] %v130
    %135 = vst [vmem:[#allocation2 + $0x18] sm:$0xff] %v131
    // Predicated region
    $region14: #{ctc_head_forward.1} parent=1 // pred_check
      _
    $region15: #{ctc_head_forward.1} parent=1 // pred_check_branch
      %137 = sbr.rel (0) target = $region17
    $region16: #{ctc_head_forward.1} parent=1 // pred_region
      %s139 = ssub.s32 512, 512
      %140 = vsyncadd [#allocation3], %s139
      %s141 = sshll.u32 [#allocation2], 4
      %s142 = int_to_ptr.vmem [resolvable:$true] %s141
      %147 = dma.vmem_to_hbm [thread:$0]  %s142, 512, %s3, [#allocation3], 256, 256, 16
    $region17: #{ctc_head_forward.1} parent=1 // pred_fallthru
      _
    // Predicated region
    $region18: #{ctc_head_forward.1} parent=1 // pred_check
      _
    $region19: #{ctc_head_forward.1} parent=1 // pred_check_branch
      %149 = sbr.rel (0) target = $region21
    $region20: #{ctc_head_forward.1} parent=1 // pred_region
      %150 = dma.done [#allocation3], 512
    $region21: #{ctc_head_forward.1} parent=1 // pred_fallthru
      _
    %151 = vsyncpa [#allocation3], 1

</llo_original>
